<compile_context>
chip_gen: v7x
topology: tpu7x:2x2x1
jax: 0.10.0
libtpu: 0.0.40
codegen_flags: <defaults>
</compile_context>

<pallas_src>
import functools

import jax
import jax.numpy as jnp
from jax.experimental import pallas as pl
from jax.experimental.pallas import tpu as pltpu

LANES = 128
_MAX_INFLIGHT_DMAS = 4          # review: 2-4 chunked DMAs in flight
_MIN_CHUNK_BYTES = 256 * 1024   # don't split arrays smaller than this


def _native_sublanes(dtype) -> int:
    # Sub-32-bit dtypes pack along sublanes: 4B -> 8, 2B -> 16, 1B -> 32 rows.
    itemsize = int(jnp.dtype(dtype).itemsize)
    return max(8, 32 // max(itemsize, 1))


def _resolve_shape(target_shape, numel):
    """Resolve a single -1 like torch.view does, with clean ValueErrors."""
    shape = list(target_shape)
    if shape.count(-1) > 1:
        raise ValueError("only one dimension may be -1 in a view shape")
    known = 1
    for s in shape:
        if s == -1:
            continue
        if s < 0:
            raise ValueError(f"invalid dimension {s} in view shape {tuple(target_shape)}")
        known *= s
    if -1 in shape:
        if known == 0 or numel % known != 0:
            raise ValueError(
                f"view shape {tuple(target_shape)} is invalid for input of size {numel}")
        shape[shape.index(-1)] = numel // known
        known = numel
    if known != numel:
        raise ValueError(
            f"view shape {tuple(target_shape)} is invalid for input of size {numel}")
    return tuple(shape)


def _slab_width(numel):
    """Widest lane-dense last dim dividing numel (fewer DMA descriptors per row)."""
    for w in (1024, 512, 256, 128):
        if numel % w == 0:
            return w
    return None


def _row_chunks(rows, lanes, dtype):
    """Static (start_row, n_rows) chunks along axis 0, on packed-tile boundaries."""
    itemsize = int(jnp.dtype(dtype).itemsize)
    sub = _native_sublanes(dtype)
    total_bytes = rows * lanes * itemsize
    n = min(_MAX_INFLIGHT_DMAS,
            max(1, total_bytes // _MIN_CHUNK_BYTES),
            max(1, rows // sub))
    base = pl.cdiv(rows, n)
    base = -(-base // sub) * sub          # round up to native packed-row multiple
    chunks = []
    r = 0
    while r < rows:
        size = min(base, rows - r)
        chunks.append((r, size))
        r += size
    return tuple(chunks)


@functools.lru_cache(maxsize=None)
def _dma_copy_callable(shape, dtype, chunks):
    """pallas_call doing a chunked HBM->HBM DMA copy of an array of `shape`."""
    n = len(chunks)
    dim0 = shape[0]

    def kernel(x_hbm, o_hbm, sems):
        copies = []
        for i, (r0, nr) in enumerate(chunks):       # unrolled, all indices static
            if r0 == 0 and nr == dim0:
                src, dst = x_hbm, o_hbm             # whole-ref copy
            else:
                src = x_hbm.at[pl.ds(r0, nr)]
                dst = o_hbm.at[pl.ds(r0, nr)]
            cp = pltpu.make_async_copy(src, dst, sems.at[i])
            cp.start()
            copies.append(cp)
        for cp in copies:
            cp.wait()

    return pl.pallas_call(
        kernel,
        out_shape=jax.ShapeDtypeStruct(shape, dtype),
        in_specs=[pl.BlockSpec(memory_space=pl.ANY)],
        out_specs=pl.BlockSpec(memory_space=pl.ANY),
        scratch_shapes=[pltpu.SemaphoreType.DMA((n,))],
    )


def _dma_copy(arr, single_chunk=False):
    shape = tuple(int(s) for s in arr.shape)
    if single_chunk or len(shape) != 2:
        chunks = ((0, shape[0]),)
    else:
        chunks = _row_chunks(shape[0], shape[1], arr.dtype)
    return _dma_copy_callable(shape, jnp.dtype(arr.dtype), chunks)(arr)


class View:
    """JAX/Pallas equivalent of the PyTorch View module (x.view(*shape)).

    Default: metadata-only reshape (matches torch .view, which never copies;
    note torch errors on non-contiguous tensors — JAX arrays are always
    logically contiguous, so that check does not apply here).
    materialize=True: force a materialized copy via chunked HBM->HBM DMA.
    """

    def __init__(self, shape, materialize=False):
        self.shape = tuple(shape)
        self.materialize = materialize

    def __call__(self, x):
        numel = int(x.size)
        out_shape = _resolve_shape(self.shape, numel)

        if not self.materialize or numel == 0 or x.ndim == 0:
            return jnp.reshape(x, out_shape)

        if numel % LANES == 0:
            # Lane-aligned: wide lane-dense slab, up to 4 row-chunked DMAs in flight.
            w = _slab_width(numel)
            slab = jnp.reshape(x, (numel // w, w))
            copied = _dma_copy(slab)
            return jnp.reshape(copied, out_shape)

        # Ragged (numel % 128 != 0): single byte-exact whole-array DMA in the
        # original shape — no pad, no post-slice, no extra HBM passes.
        copied = _dma_copy(x, single_chunk=True)
        return jnp.reshape(copied, out_shape)


if __name__ == "__main__":
    key = jax.random.PRNGKey(0)
    k1, k2, k3, k4 = jax.random.split(key, 4)

    # Small NCHW feature map feeding a View, as in the GCNN-LSTM model.
    x = jax.random.normal(k1, (2, 4, 16, 16), dtype=jnp.float32)
    ref = jnp.reshape(x, (2, 1024))

    # 1) Default path: metadata-only reshape (torch .view semantics).
    y_view = jax.block_until_ready(View((-1, 4 * 16 * 16))(x))
    assert y_view.shape == (2, 1024) and y_view.dtype == x.dtype
    assert bool(jnp.array_equal(y_view, ref))

    # 2) Materialized path: single whole-slab HBM->HBM DMA (2048 f32).
    y_copy = jax.block_until_ready(View((-1, 4 * 16 * 16), materialize=True)(x))
    assert y_copy.shape == (2, 1024) and y_copy.dtype == x.dtype
    assert bool(jnp.array_equal(y_copy, ref))

    # 3) bf16 input: dtype-aware (16-row packed) chunk alignment.
    xb = jax.random.normal(k2, (2, 8, 16, 16)).astype(jnp.bfloat16)
    yb = jax.block_until_ready(View((2, -1), materialize=True)(xb))
    assert yb.shape == (2, 2048) and yb.dtype == xb.dtype
    assert bool(jnp.array_equal(yb, jnp.reshape(xb, (2, 2048))))

    # 4) Ragged numel (105, not a multiple of 128): byte-exact single DMA,
    #    no pad / post-slice passes.
    xr = jax.random.normal(k3, (3, 5, 7), dtype=jnp.float32)
    yr = jax.block_until_ready(View((5, 21), materialize=True)(xr))
    assert yr.shape == (5, 21) and yr.dtype == xr.dtype
    assert bool(jnp.array_equal(yr, jnp.reshape(xr, (5, 21))))

    # 5) Larger (1 MiB) input: exercises 4 row-chunked DMAs in flight.
    xl = jax.random.normal(k4, (8, 32, 32, 32), dtype=jnp.float32)
    yl = jax.block_until_ready(View((8, -1), materialize=True)(xl))
    assert yl.shape == (8, 32 * 32 * 32) and yl.dtype == xl.dtype
    assert bool(jnp.array_equal(yl, jnp.reshape(xl, (8, 32 * 32 * 32))))

    print("KERNEL_OK")
</pallas_src>

<mosaic_0001>
module attributes {stable_mosaic.version = 11 : i64} {
  func.func @kernel(%arg0: memref<2x1024xf32, #tpu.memory_space<any>>, %arg1: memref<2x1024xf32, #tpu.memory_space<any>>, %arg2: memref<1x!tpu.dma_semaphore, #tpu.memory_space<semaphore_mem>>) attributes {dimension_semantics = [], scalar_prefetch = 0 : i64, scratch_operands = 1 : i64, tpu.core_type = #tpu.core_type<tc>} {
    %c0_i32 = arith.constant 0 : i32
    %0 = tpu.memref_slice %arg2[%c0_i32] : memref<1x!tpu.dma_semaphore, #tpu.memory_space<semaphore_mem>> -> memref<1x!tpu.dma_semaphore, #tpu.memory_space<semaphore_mem>>
    %1 = tpu.memref_squeeze %0 : memref<1x!tpu.dma_semaphore, #tpu.memory_space<semaphore_mem>> -> memref<!tpu.dma_semaphore, #tpu.memory_space<semaphore_mem>>
    tpu.enqueue_dma source(%arg0 : memref<2x1024xf32, #tpu.memory_space<any>>) target(%arg1 : memref<2x1024xf32, #tpu.memory_space<any>>) target_semaphore(%1 : memref<!tpu.dma_semaphore, #tpu.memory_space<semaphore_mem>>)
    %c0_i32_0 = arith.constant 0 : i32
    %2 = tpu.memref_slice %arg2[%c0_i32_0] : memref<1x!tpu.dma_semaphore, #tpu.memory_space<semaphore_mem>> -> memref<1x!tpu.dma_semaphore, #tpu.memory_space<semaphore_mem>>
    %3 = tpu.memref_squeeze %2 : memref<1x!tpu.dma_semaphore, #tpu.memory_space<semaphore_mem>> -> memref<!tpu.dma_semaphore, #tpu.memory_space<semaphore_mem>>
    tpu.wait_dma2 semaphore(%3 : memref<!tpu.dma_semaphore, #tpu.memory_space<semaphore_mem>>) src(%arg0 : memref<2x1024xf32, #tpu.memory_space<any>>) dst(%arg1 : memref<2x1024xf32, #tpu.memory_space<any>>)
    return
  }
}

</mosaic_0001>

<llo_original>
// kernel: tpu_custom_call.1
$region0: #{tpu_custom_call.1}
  #allocation0 [shape = 'u32[]', space=smem, size = 0x4, offset = 0x4, fixed_abs, tag = 'smem constant byte address 0x4 - core index']
  #allocation1 [shape = 'u32[144,128]{1,0:T(1,128)}', space=vmem, size = 0x12000, scoped, tag = 'internal scratch']
  #allocation2 [shape = 's32[1]{0}', space=sflag, size = 0x4, scoped, tag = 'scratch operand']
  #allocation3 [shape = 's32[]', space=sflag, size = 0x4, offset = 0, fixed_abs, tag = 'sflag constant byte address 0x0 - dummy sync flag']
  #allocation4 [shape = 'u32[0]{0}', space=smem, size = 0, offset = 0, fixed_abs, tag = 'smem constant byte address 0x0 - null']
  %s0 = inlined_call_operand.hbm [shape: f32[2,1024], index: 0, kind: input, shape index: {}]
  %s1 = inlined_call_operand.hbm [shape: f32[2,1024], index: 1, kind: output, shape index: {}]
  %s2 = sld [smem:[#allocation0]]
  $region2: #{tpu_custom_call.1} parent=0
    _
  %s4 = ssub.s32 1, %s2
  %s5 = scalar_select 0, %s4, %s2
  %s7 = sshll.u32 1, 14
  %s8 = sxor.u32 4294967295, %s7
  %s11 = sshll.u32 3, 24
  %s12 = sxor.u32 4294967295, %s11
  %s13 = sand.u32 0, %s12
  %s15 = sor.u32 %s13, 0
  %18 = dma.general %s0, 256, %s1, [#allocation2], [#allocation3], [#allocation4], %s15, 0
  %s19 = smul.u32 2, 1
  %s20 = smul.u32 %s19, 8
  %s21 = sshll.u32 %s20, 4
  %22 = dma.done [#allocation2], %s21
  %23 = vsyncmov [#allocation2]
  %s24 = vpop.sfrf %23
  %p25 = scmp.eq.s32.totalorder %s24, 0
  %p26 = pneg %p25
  %28 = shalt.err (%p26)

</llo_original>
